<compile_context>
chip_gen: v7x
topology: tpu7x:2x2x1
jax: 0.10.0
libtpu: 0.0.40
codegen_flags: <defaults>
</compile_context>

<pallas_src>
import jax
import jax.numpy as jnp
from jax.experimental import pallas as pl
from jax.experimental.pallas import tpu as pltpu


def _make_acc_kernel(ignore_index: int, n_rows: int, tiles_per_core: int):
    def acc_kernel(y_pred_ref, y_true_ref, corr_ref, cnt_ref):
        p = pl.program_id(0)      # core ("parallel") axis
        i = pl.program_id(1)      # reduction ("arbitrary") axis

        # Per-core accumulator init on the first reduction step.
        @pl.when(i == 0)
        def _init():
            corr_ref[...] = jnp.zeros_like(corr_ref)
            cnt_ref[...] = jnp.zeros_like(cnt_ref)

        # Cast the tile to f32 after the DMA (bf16 stays bf16 in HBM; the
        # cast is cheap VPU work and keeps v5e happy).
        yp = y_pred_ref[...].astype(jnp.float32)       # (TN, C)
        yt = y_true_ref[...]                           # (TN, 1) int32
        tn, c = yp.shape

        # Global row index of each row in this tile; rows past the true N
        # (partial last tile or clamped overflow tile) contribute nothing.
        tile_idx = p * tiles_per_core + i              # unclamped linear tile
        row = jax.lax.broadcasted_iota(jnp.int32, (tn, 1), 0) + tile_idx * tn
        in_bounds = row < n_rows                       # (TN, 1) bool

        # argmax over the class (lane) axis, first occurrence on ties.
        col = jax.lax.broadcasted_iota(jnp.int32, (tn, c), 1)
        maxv = jnp.max(yp, axis=1, keepdims=True)              # (TN, 1)
        cand = jnp.where(yp == maxv, col, jnp.int32(c))        # sentinel = C
        pred = jnp.min(cand, axis=1, keepdims=True)            # (TN, 1) int32

        valid = jnp.logical_and(in_bounds, yt != jnp.int32(ignore_index))
        weights = valid.astype(jnp.float32)                    # (TN, 1)
        correct = jnp.logical_and(valid, pred == yt).astype(jnp.float32)

        corr_ref[...] = corr_ref[...] + jnp.sum(correct)
        cnt_ref[...] = cnt_ref[...] + jnp.sum(weights)

    return acc_kernel


def _choose_tile_rows(n: int, c: int, itemsize: int) -> int:
    # ~1 MiB y_pred tile (x2 double-buffering per input stays well under the
    # 32 MiB scoped VMEM budget, v7x included).
    tn = (1 << 20) // max(1, c * itemsize)
    tn = max(8, (tn // 8) * 8)
    tn = min(tn, 1024)
    if n <= tn:
        return n          # single block == full dim (always layout-legal)
    return tn


def accuracy(y_pred: jax.Array,
             y_true: jax.Array,
             ignore_index: int = -100,
             reduction: str = "mean",
             tile_rows: int | None = None) -> jax.Array:
    """Pallas equivalent of poutyne.Accuracy()(y_pred, y_true).

    y_pred: (N, C) float (f32 or bf16, fed to the kernel in its native dtype)
    y_true: (N,)   int
    Returns a scalar float32 (accuracy in percent) for 'mean' / 'sum'.
    """
    if reduction not in ("none", "mean", "sum"):
        raise ValueError("Reduction is not in ['none', 'mean', 'sum']")
    if reduction == "none":
        # TODO(synk): 'none' (per-sample output) needs a per-row out_spec; not implemented.
        raise NotImplementedError("reduction='none' is not implemented in the Pallas kernel")

    n, c = y_pred.shape
    y_true2d = y_true.reshape(n, 1).astype(jnp.int32)

    itemsize = jnp.dtype(y_pred.dtype).itemsize
    if tile_rows is None:
        tn = _choose_tile_rows(n, c, itemsize)
    else:
        tn = max(8, (int(tile_rows) // 8) * 8)
        if n <= tn:
            tn = n

    num_tiles = (n + tn - 1) // tn
    cores = 2                                   # v7x: 2 TCs; harmless on v5e/v6e
    tiles_per_core = (num_tiles + cores - 1) // cores
    last_tile = num_tiles - 1

    def in_map(p, i):
        # Clamp overflow tiles to the last valid block; their rows are masked
        # out in-kernel via the (unclamped) global row index.
        t = jnp.minimum(p * tiles_per_core + i, last_tile)
        return (t, 0)

    kernel = _make_acc_kernel(ignore_index, n, tiles_per_core)

    corr, cnt = pl.pallas_call(
        kernel,
        out_shape=(
            jax.ShapeDtypeStruct((cores, 1, 1), jnp.float32),
            jax.ShapeDtypeStruct((cores, 1, 1), jnp.float32),
        ),
        grid_spec=pltpu.PrefetchScalarGridSpec(
            num_scalar_prefetch=0,
            grid=(cores, tiles_per_core),
            in_specs=[
                pl.BlockSpec((tn, c), in_map),
                pl.BlockSpec((tn, 1), in_map),
            ],
            out_specs=[
                pl.BlockSpec((1, 1, 1), lambda p, i: (p, 0, 0)),
                pl.BlockSpec((1, 1, 1), lambda p, i: (p, 0, 0)),
            ],
        ),
        compiler_params=pltpu.CompilerParams(
            dimension_semantics=("parallel", "arbitrary"),
            vmem_limit_bytes=32 * 1024 * 1024,
        ),
    )(y_pred, y_true2d)

    acc_sum = jnp.sum(corr)
    num_labels = jnp.sum(cnt)
    if reduction == "mean":
        return acc_sum / num_labels * jnp.float32(100.0)
    return acc_sum * jnp.float32(100.0)          # 'sum'


if __name__ == "__main__":
    key = jax.random.PRNGKey(0)
    k1, k2, k3 = jax.random.split(key, 3)

    N, C = 24, 16
    y_pred = jax.random.normal(k1, (N, C), dtype=jnp.float32)
    y_true = jax.random.randint(k2, (N,), 0, C, dtype=jnp.int32)
    ignore_mask = jax.random.bernoulli(k3, p=0.25, shape=(N,))
    y_true = jnp.where(ignore_mask, jnp.int32(-100), y_true)

    def ref_acc(yp, yt, ignore_index=-100):
        pred = jnp.argmax(yp.astype(jnp.float32), axis=1).astype(jnp.int32)
        w = (yt != ignore_index).astype(jnp.float32)
        return jnp.sum((pred == yt).astype(jnp.float32) * w) / jnp.sum(w) * 100.0

    # f32 input, small forced tile so the multi-tile grid + partial-tile
    # masking + 2-core split path is exercised (3 tiles over grid (2, 2)).
    res_f32 = accuracy(y_pred, y_true, tile_rows=8)
    jax.block_until_ready(res_f32)
    ref_f32 = ref_acc(y_pred, y_true)
    assert jnp.allclose(res_f32, ref_f32, atol=1e-4), (res_f32, ref_f32)

    # bf16 input fed straight to the kernel (native dtype; default tiling).
    yp_bf16 = y_pred.astype(jnp.bfloat16)
    res_bf16 = accuracy(yp_bf16, y_true)
    jax.block_until_ready(res_bf16)
    ref_bf16 = ref_acc(yp_bf16, y_true)
    assert jnp.allclose(res_bf16, ref_bf16, atol=1e-3), (res_bf16, ref_bf16)

    # 'sum' reduction path.
    res_sum = accuracy(y_pred, y_true, reduction="sum", tile_rows=8)
    jax.block_until_ready(res_sum)
    w_ref = (y_true != -100).astype(jnp.float32)
    pred_ref = jnp.argmax(y_pred, axis=1).astype(jnp.int32)
    ref_sum = jnp.sum((pred_ref == y_true).astype(jnp.float32) * w_ref) * 100.0
    assert jnp.allclose(res_sum, ref_sum, atol=1e-4), (res_sum, ref_sum)

    print("KERNEL_OK")
</pallas_src>

<mosaic_0001>
module attributes {stable_mosaic.version = 11 : i64} {
  func.func @acc_kernel(%arg0: i32, %arg1: i32, %arg2: memref<8x16xf32, #tpu.memory_space<vmem>>, %arg3: memref<8x1xi32, #tpu.memory_space<vmem>>, %arg4: memref<1x1x1xf32, #tpu.memory_space<vmem>>, %arg5: memref<1x1x1xf32, #tpu.memory_space<vmem>>) attributes {dimension_semantics = [#tpu.dimension_semantics<parallel>, #tpu.dimension_semantics<arbitrary>], iteration_bounds = array<i64: 2, 2>, scalar_prefetch = 0 : i64, scratch_operands = 0 : i64, tpu.core_type = #tpu.core_type<tc>, window_params = [{transform_indices = @transform_0, window_bounds = array<i64: 8, 16>}, {transform_indices = @transform_1, window_bounds = array<i64: 8, 1>}, {transform_indices = @transform_2, window_bounds = array<i64: 1, 1, 1>}, {transform_indices = @transform_3, window_bounds = array<i64: 1, 1, 1>}]} {
    %c0_i32 = arith.constant 0 : i32
    %0 = arith.cmpi eq, %arg1, %c0_i32 : i32
    %1 = arith.extui %0 : i1 to i32
    %c0_i32_0 = arith.constant 0 : i32
    %2 = arith.cmpi ne, %1, %c0_i32_0 : i32
    scf.if %2 {
      %cst_19 = arith.constant 0.000000e+00 : f32
      %47 = vector.broadcast %cst_19 : f32 to vector<1x1x1xf32>
      %c0_20 = arith.constant 0 : index
      %c0_21 = arith.constant 0 : index
      %c0_22 = arith.constant 0 : index
      %48 = vector.load %arg4[%c0_20, %c0_21, %c0_22] : memref<1x1x1xf32, #tpu.memory_space<vmem>>, vector<1x1x1xf32>
      tpu.vector_store %arg4[%c0_20, %c0_21, %c0_22], %47 {strides = array<i32>} : memref<1x1x1xf32, #tpu.memory_space<vmem>>, vector<1x1x1xf32>,
      %cst_23 = arith.constant 0.000000e+00 : f32
      %49 = vector.broadcast %cst_23 : f32 to vector<1x1x1xf32>
      %c0_24 = arith.constant 0 : index
      %c0_25 = arith.constant 0 : index
      %c0_26 = arith.constant 0 : index
      %50 = vector.load %arg5[%c0_24, %c0_25, %c0_26] : memref<1x1x1xf32, #tpu.memory_space<vmem>>, vector<1x1x1xf32>
      tpu.vector_store %arg5[%c0_24, %c0_25, %c0_26], %49 {strides = array<i32>} : memref<1x1x1xf32, #tpu.memory_space<vmem>>, vector<1x1x1xf32>,
    } else {
    }
    %c0 = arith.constant 0 : index
    %c0_1 = arith.constant 0 : index
    %3 = vector.load %arg2[%c0, %c0_1] : memref<8x16xf32, #tpu.memory_space<vmem>>, vector<8x16xf32>
    %c0_2 = arith.constant 0 : index
    %c0_3 = arith.constant 0 : index
    %4 = vector.load %arg3[%c0_2, %c0_3] : memref<8x1xi32, #tpu.memory_space<vmem>>, vector<8x1xi32>
    %c2_i32 = arith.constant 2 : i32
    %5 = arith.muli %arg0, %c2_i32 : i32
    %6 = arith.addi %5, %arg1 : i32
    %7 = tpu.iota {dimensions = array<i32: 0>} : vector<8x1xi32>
    %c8_i32 = arith.constant 8 : i32
    %8 = arith.muli %6, %c8_i32 : i32
    %9 = vector.broadcast %8 : i32 to vector<8x1xi32>
    %10 = arith.addi %7, %9 : vector<8x1xi32>
    %c24_i32 = arith.constant 24 : i32
    %11 = vector.broadcast %c24_i32 : i32 to vector<8x1xi32>
    %12 = arith.cmpi slt, %10, %11 : vector<8x1xi32>
    %13 = tpu.iota {dimensions = array<i32: 1>} : vector<8x16xi32>
    %cst = arith.constant dense<0xFF800000> : vector<8xf32>
    %14 = vector.multi_reduction <maximumf>, %3, %cst [1] : vector<8x16xf32> to vector<8xf32>
    %15 = vector.shape_cast %14 : vector<8xf32> to vector<8x1xf32>
    %16 = vector.broadcast %15 : vector<8x1xf32> to vector<8x16xf32>
    %17 = arith.cmpf oeq, %3, %16 : vector<8x16xf32>
    %c16_i32 = arith.constant 16 : i32
    %18 = vector.broadcast %c16_i32 : i32 to vector<8x16xi32>
    %19 = arith.select %17, %13, %18 : vector<8x16xi1>, vector<8x16xi32>
    %cst_4 = arith.constant dense<2147483647> : vector<8xi32>
    %20 = vector.multi_reduction <minsi>, %19, %cst_4 [1] : vector<8x16xi32> to vector<8xi32>
    %21 = vector.shape_cast %20 : vector<8xi32> to vector<8x1xi32>
    %c-100_i32 = arith.constant -100 : i32
    %22 = vector.broadcast %c-100_i32 : i32 to vector<8x1xi32>
    %23 = arith.cmpi ne, %4, %22 : vector<8x1xi32>
    %24 = arith.andi %12, %23 : vector<8x1xi1>
    %25 = arith.extui %24 : vector<8x1xi1> to vector<8x1xi32>
    %26 = arith.sitofp %25 : vector<8x1xi32> to vector<8x1xf32>
    %27 = arith.cmpi eq, %21, %4 : vector<8x1xi32>
    %28 = arith.andi %24, %27 : vector<8x1xi1>
    %29 = arith.extui %28 : vector<8x1xi1> to vector<8x1xi32>
    %30 = arith.sitofp %29 : vector<8x1xi32> to vector<8x1xf32>
    %c0_5 = arith.constant 0 : index
    %c0_6 = arith.constant 0 : index
    %c0_7 = arith.constant 0 : index
    %31 = vector.load %arg4[%c0_5, %c0_6, %c0_7] : memref<1x1x1xf32, #tpu.memory_space<vmem>>, vector<1x1x1xf32>
    %32 = vector.shape_cast %30 : vector<8x1xf32> to vector<1x8x1xf32>
    %cst_8 = arith.constant dense<0.000000e+00> : vector<1xf32>
    %33 = vector.multi_reduction <add>, %32, %cst_8 [1, 2] : vector<1x8x1xf32> to vector<1xf32>
    %34 = vector.shape_cast %33 : vector<1xf32> to vector<1x1x1xf32>
    %35 = vector.extract %34[0, 0, 0] : f32 from vector<1x1x1xf32>
    %36 = vector.broadcast %35 : f32 to vector<1x1x1xf32>
    %37 = arith.addf %31, %36 : vector<1x1x1xf32>
    %c0_9 = arith.constant 0 : index
    %c0_10 = arith.constant 0 : index
    %c0_11 = arith.constant 0 : index
    %38 = vector.load %arg4[%c0_9, %c0_10, %c0_11] : memref<1x1x1xf32, #tpu.memory_space<vmem>>, vector<1x1x1xf32>
    tpu.vector_store %arg4[%c0_9, %c0_10, %c0_11], %37 {strides = array<i32>} : memref<1x1x1xf32, #tpu.memory_space<vmem>>, vector<1x1x1xf32>,
    %c0_12 = arith.constant 0 : index
    %c0_13 = arith.constant 0 : index
    %c0_14 = arith.constant 0 : index
    %39 = vector.load %arg5[%c0_12, %c0_13, %c0_14] : memref<1x1x1xf32, #tpu.memory_space<vmem>>, vector<1x1x1xf32>
    %40 = vector.shape_cast %26 : vector<8x1xf32> to vector<1x8x1xf32>
    %cst_15 = arith.constant dense<0.000000e+00> : vector<1xf32>
    %41 = vector.multi_reduction <add>, %40, %cst_15 [1, 2] : vector<1x8x1xf32> to vector<1xf32>
    %42 = vector.shape_cast %41 : vector<1xf32> to vector<1x1x1xf32>
    %43 = vector.extract %42[0, 0, 0] : f32 from vector<1x1x1xf32>
    %44 = vector.broadcast %43 : f32 to vector<1x1x1xf32>
    %45 = arith.addf %39, %44 : vector<1x1x1xf32>
    %c0_16 = arith.constant 0 : index
    %c0_17 = arith.constant 0 : index
    %c0_18 = arith.constant 0 : index
    %46 = vector.load %arg5[%c0_16, %c0_17, %c0_18] : memref<1x1x1xf32, #tpu.memory_space<vmem>>, vector<1x1x1xf32>
    tpu.vector_store %arg5[%c0_16, %c0_17, %c0_18], %45 {strides = array<i32>} : memref<1x1x1xf32, #tpu.memory_space<vmem>>, vector<1x1x1xf32>,
    return
  }
  func.func @transform_0(%arg0: i32, %arg1: i32) -> (i32, i32) {
    %c2_i32 = arith.constant 2 : i32
    %0 = arith.muli %arg0, %c2_i32 : i32
    %1 = arith.addi %0, %arg1 : i32
    %c2_i32_0 = arith.constant 2 : i32
    %2 = arith.minsi %1, %c2_i32_0 : i32
    %c0_i32 = arith.constant 0 : i32
    %c0_i32_1 = arith.constant 0 : i32
    return %2, %c0_i32 : i32, i32
  }
  func.func @transform_1(%arg0: i32, %arg1: i32) -> (i32, i32) {
    %c2_i32 = arith.constant 2 : i32
    %0 = arith.muli %arg0, %c2_i32 : i32
    %1 = arith.addi %0, %arg1 : i32
    %c2_i32_0 = arith.constant 2 : i32
    %2 = arith.minsi %1, %c2_i32_0 : i32
    %c0_i32 = arith.constant 0 : i32
    %c0_i32_1 = arith.constant 0 : i32
    return %2, %c0_i32 : i32, i32
  }
  func.func @transform_2(%arg0: i32, %arg1: i32) -> (i32, i32, i32) {
    %c0_i32 = arith.constant 0 : i32
    %c0_i32_0 = arith.constant 0 : i32
    %c0_i32_1 = arith.constant 0 : i32
    return %arg0, %c0_i32, %c0_i32_0 : i32, i32, i32
  }
  func.func @transform_3(%arg0: i32, %arg1: i32) -> (i32, i32, i32) {
    %c0_i32 = arith.constant 0 : i32
    %c0_i32_0 = arith.constant 0 : i32
    %c0_i32_1 = arith.constant 0 : i32
    return %arg0, %c0_i32, %c0_i32_0 : i32, i32, i32
  }
}

</mosaic_0001>

<llo_original>
// kernel: tpu_custom_call.1
$region0: #{tpu_custom_call.1}
  #allocation0 [shape = 'u32[]', space=smem, size = 0x4, offset = 0x4, fixed_abs, tag = 'smem constant byte address 0x4 - core index']
  #allocation1 [shape = 'u32[144,128]{1,0:T(1,128)}', space=vmem, size = 0x12000, scoped, tag = 'internal scratch']
  %s0 = inlined_call_operand.vmem [shape: f32[24,16], index: 0, kind: input, shape index: {}]
  %s1 = inlined_call_operand.vmem [shape: s32[24,1], index: 1, kind: input, shape index: {}]
  %s2 = inlined_call_operand.vmem [shape: f32[2,1,1], index: 2, kind: output, shape index: {0}]
  %s3 = inlined_call_operand.vmem [shape: f32[2,1,1], index: 3, kind: output, shape index: {1}]
  %4 = xla_tuple %s2, %s3
  %s5 = sld [smem:[#allocation0]]
  $region53: #{tpu_custom_call.1} parent=0
    _
  %s7 = ssub.s32 1, %s5
  %s8 = scalar_select 0, %s7, %s5
  loop: start=0, step=1, limit=6
  $region2: #{tpu_custom_call.1} parent=0 // loop_pre_header
    _
  $region3: #{tpu_custom_call.1} parent=0 // loop_header
    %s10 = sphi 0, %s14
    %p11 = scmp.ge.s32.totalorder %s10, 6
    %s17 = sphi 0, %s29
    %s18 = sphi 0, %s25
    %s19 = sphi 0, %s17
    %s20 = sphi 0, %s18
    %s21 = sphi 0, %s19
    %s22 = sphi 0, %s20
    %s40 = sphi 0, %s42
    %s43 = sphi 0, %s40
    %s44 = sphi 0, %s43
    %s60 = sphi 0, %s44
    %s74 = sphi 0, %s76
    %s77 = sphi 0, %s74
    %s78 = sphi 0, %s77
    %s94 = sphi 0, %s78
    %s100 = sphi 0, %s102
    %s103 = sphi 0, %s100
    %s104 = sphi 0, %s103
    %s120 = sphi 0, %s104
    %s126 = sphi 0, %s128
    %s129 = sphi 0, %s126
    %s130 = sphi 0, %s129
    %s146 = sphi 0, %s130
  $region4: #{tpu_custom_call.1} parent=0 // loop_header_branch
    %13 = sbr.rel (%p11) target = $region8
  $region5: #{tpu_custom_call.1} parent=0 // loop_body
    %s15 = ssub.s32 %s10, 1
    %s16 = ssub.s32 %s10, 2
    %s23 = sadd.s32 1, %s18
    %p24 = scmp.ge.s32.totalorder %s23, 2
    %s25 = scalar_select %p24, 0, %s23
    %s26 = sadd.s32 1, %s17
    %s27 = scalar_select %p24, %s26, %s17
    %p28 = scmp.ge.s32.totalorder %s27, 2
    %s29 = scalar_select %p28, 0, %s27
    %s30 = smul.u32 %s17, 2
    %s31 = sadd.s32 %s30, %s18
    %p32 = scmp.lt.s32.totalorder %s31, 2
    %s33 = scalar_select %p32, %s31, 2
    %s34 = smul.u32 %s29, 2
    %s35 = sadd.s32 %s34, %s25
    %p36 = scmp.lt.s32.totalorder %s35, 2
    %s37 = scalar_select %p36, %s35, 2
    %s38 = ssub.s32 %s33, %s37
    %p39 = scmp.eq.s32.totalorder %s38, 0
    %s41 = sadd.s32 %s40, 1
    %s42 = scalar_select %p39, %s40, %s41
    %p45 = pneg %p39
    %p46 = scmp.eq.s32.totalorder %s10, 3
    %p47 = por %p45, %p46
    %p48 = scmp.ne.s32.totalorder %s40, %s43
    %p49 = scmp.eq.s32.totalorder %s10, 0
    %p50 = por %p48, %p49
    %p51 = scmp.ne.s32.totalorder %s40, %s43
    %p52 = scmp.eq.s32.totalorder %s15, 3
    %p53 = por %p51, %p52
    %p54 = scmp.ne.s32.totalorder %s43, %s44
    %p55 = scmp.eq.s32.totalorder %s15, 0
    %p56 = por %p54, %p55
    %p57 = scmp.ne.s32.totalorder %s43, %s44
    %p58 = scmp.eq.s32.totalorder %s16, 3
    %p59 = por %p57, %p58
    %p61 = scmp.ne.s32.totalorder %s44, %s60
    %p62 = scmp.eq.s32.totalorder %s16, 0
    %p63 = por %p61, %p62
    %s64 = smul.u32 %s17, 2
    %s65 = sadd.s32 %s64, %s18
    %p66 = scmp.lt.s32.totalorder %s65, 2
    %s67 = scalar_select %p66, %s65, 2
    %s68 = smul.u32 %s29, 2
    %s69 = sadd.s32 %s68, %s25
    %p70 = scmp.lt.s32.totalorder %s69, 2
    %s71 = scalar_select %p70, %s69, 2
    %s72 = ssub.s32 %s67, %s71
    %p73 = scmp.eq.s32.totalorder %s72, 0
    %s75 = sadd.s32 %s74, 1
    %s76 = scalar_select %p73, %s74, %s75
    %p79 = pneg %p73
    %p80 = scmp.eq.s32.totalorder %s10, 3
    %p81 = por %p79, %p80
    %p82 = scmp.ne.s32.totalorder %s74, %s77
    %p83 = scmp.eq.s32.totalorder %s10, 0
    %p84 = por %p82, %p83
    %p85 = scmp.ne.s32.totalorder %s74, %s77
    %p86 = scmp.eq.s32.totalorder %s15, 3
    %p87 = por %p85, %p86
    %p88 = scmp.ne.s32.totalorder %s77, %s78
    %p89 = scmp.eq.s32.totalorder %s15, 0
    %p90 = por %p88, %p89
    %p91 = scmp.ne.s32.totalorder %s77, %s78
    %p92 = scmp.eq.s32.totalorder %s16, 3
    %p93 = por %p91, %p92
    %p95 = scmp.ne.s32.totalorder %s78, %s94
    %p96 = scmp.eq.s32.totalorder %s16, 0
    %p97 = por %p95, %p96
    %s98 = ssub.s32 %s17, %s29
    %p99 = scmp.eq.s32.totalorder %s98, 0
    %s101 = sadd.s32 %s100, 1
    %s102 = scalar_select %p99, %s100, %s101
    %p105 = pneg %p99
    %p106 = scmp.eq.s32.totalorder %s10, 3
    %p107 = por %p105, %p106
    %p108 = scmp.ne.s32.totalorder %s100, %s103
    %p109 = scmp.eq.s32.totalorder %s10, 0
    %p110 = por %p108, %p109
    %p111 = scmp.ne.s32.totalorder %s100, %s103
    %p112 = scmp.eq.s32.totalorder %s15, 3
    %p113 = por %p111, %p112
    %p114 = scmp.ne.s32.totalorder %s103, %s104
    %p115 = scmp.eq.s32.totalorder %s15, 0
    %p116 = por %p114, %p115
    %p117 = scmp.ne.s32.totalorder %s103, %s104
    %p118 = scmp.eq.s32.totalorder %s16, 3
    %p119 = por %p117, %p118
    %p121 = scmp.ne.s32.totalorder %s104, %s120
    %p122 = scmp.eq.s32.totalorder %s16, 0
    %p123 = por %p121, %p122
    %s124 = ssub.s32 %s17, %s29
    %p125 = scmp.eq.s32.totalorder %s124, 0
    %s127 = sadd.s32 %s126, 1
    %s128 = scalar_select %p125, %s126, %s127
    %p131 = pneg %p125
    %p132 = scmp.eq.s32.totalorder %s10, 3
    %p133 = por %p131, %p132
    %p134 = scmp.ne.s32.totalorder %s126, %s129
    %p135 = scmp.eq.s32.totalorder %s10, 0
    %p136 = por %p134, %p135
    %p137 = scmp.ne.s32.totalorder %s126, %s129
    %p138 = scmp.eq.s32.totalorder %s15, 3
    %p139 = por %p137, %p138
    %p140 = scmp.ne.s32.totalorder %s129, %s130
    %p141 = scmp.eq.s32.totalorder %s15, 0
    %p142 = por %p140, %p141
    %p143 = scmp.ne.s32.totalorder %s129, %s130
    %p144 = scmp.eq.s32.totalorder %s16, 3
    %p145 = por %p143, %p144
    %p147 = scmp.ne.s32.totalorder %s130, %s146
    %p148 = scmp.eq.s32.totalorder %s16, 0
    %p149 = por %p147, %p148
    %p150 = scmp.le.s32.totalorder 1, %s10
    %p151 = scmp.lt.s32.totalorder %s10, 5
    %p152 = pnand %p150, %p151
    %p153 = pneg %p152
    // Predicated region
    $region9: #{tpu_custom_call.1} parent=5 // pred_check
      _
    $region10: #{tpu_custom_call.1} parent=5 // pred_check_branch
      %155 = sbr.rel (%p152) target = $region12
    $region11: #{tpu_custom_call.1} parent=5 // pred_region
      %s156 = ssub.s32 %s10, 1
    $region12: #{tpu_custom_call.1} parent=5 // pred_fallthru
      _
    %p157 = scmp.lt.s32.totalorder %s10, 4
    // Predicated region
    $region13: #{tpu_custom_call.1} parent=5 // pred_check
      %p158 = pneg %p157
    $region14: #{tpu_custom_call.1} parent=5 // pred_check_branch
      %160 = sbr.rel (%p158) target = $region16
    $region15: #{tpu_custom_call.1} parent=5 // pred_region
      // Predicated region
      $region17: #{tpu_custom_call.1} parent=15 // pred_check
        %p161 = pneg %p50
      $region18: #{tpu_custom_call.1} parent=15 // pred_check_branch
        %163 = sbr.rel (%p161) target = $region20
      $region19: #{tpu_custom_call.1} parent=15 // pred_region
        %s164 = smul.u32 %s17, 2
        %s165 = sadd.s32 %s164, %s18
        %p166 = scmp.lt.s32.totalorder %s165, 2
        %s167 = scalar_select %p166, %s165, 2
        %p168 = scmp.lt.s32.totalorder %s167, 2
        %s169 = scalar_select %p168, %s167, 2
        %s170 = smul.addr %s169, 8
        %s171 = scalar_lea.vmem %s0, %s170
        %s172 = smul.u32 %s17, 2
        %s173 = sadd.s32 %s172, %s18
        %p174 = scmp.lt.s32.totalorder %s173, 2
        %s175 = scalar_select %p174, %s173, 2
      $region20: #{tpu_custom_call.1} parent=15 // pred_fallthru
        _
      // Predicated region
      $region21: #{tpu_custom_call.1} parent=15 // pred_check
        %p176 = pneg %p84
      $region22: #{tpu_custom_call.1} parent=15 // pred_check_branch
        %178 = sbr.rel (%p176) target = $region24
      $region23: #{tpu_custom_call.1} parent=15 // pred_region
        %s179 = smul.u32 %s17, 2
        %s180 = sadd.s32 %s179, %s18
        %p181 = scmp.lt.s32.totalorder %s180, 2
        %s182 = scalar_select %p181, %s180, 2
        %p183 = scmp.lt.s32.totalorder %s182, 2
        %s184 = scalar_select %p183, %s182, 2
        %s185 = smul.addr %s184, 8
        %s186 = scalar_lea.vmem %s1, %s185
        %s187 = smul.u32 %s17, 2
        %s188 = sadd.s32 %s187, %s18
        %p189 = scmp.lt.s32.totalorder %s188, 2
        %s190 = scalar_select %p189, %s188, 2
      $region24: #{tpu_custom_call.1} parent=15 // pred_fallthru
        _
    $region16: #{tpu_custom_call.1} parent=5 // pred_fallthru
      _
    %p191 = scmp.le.s32.totalorder 1, %s10
    %p192 = scmp.lt.s32.totalorder %s10, 5
    %p193 = pnand %p191, %p192
    %p194 = pneg %p193
    // Predicated region
    $region25: #{tpu_custom_call.1} parent=5 // pred_check
      _
    $region26: #{tpu_custom_call.1} parent=5 // pred_check_branch
      %196 = sbr.rel (%p193) target = $region28
    $region27: #{tpu_custom_call.1} parent=5 // pred_region
      %s197 = ssub.s32 %s10, 1
      %s198 = smul.u32 %s19, 2
      %s199 = sadd.s32 %s198, %s20
      %p200 = scmp.lt.s32.totalorder %s199, 2
      %s201 = scalar_select %p200, %s199, 2
      %p202 = scmp.lt.s32.totalorder %s201, 2
      %s203 = scalar_select %p202, %s201, 2
      %s204 = smul.addr %s203, 8
      %s205 = scalar_lea.vmem %s0, %s204
      %p206 = pneg %p56
      %p207 = pneg %p53
      %s208 = smul.u32 %s19, 2
      %s209 = sadd.s32 %s208, %s20
      %p210 = scmp.lt.s32.totalorder %s209, 2
      %s211 = scalar_select %p210, %s209, 2
      %p212 = scmp.lt.s32.totalorder %s211, 2
      %s213 = scalar_select %p212, %s211, 2
      %s214 = smul.addr %s213, 8
      %s215 = scalar_lea.vmem %s1, %s214
      %p216 = pneg %p90
      %p217 = pneg %p87
      %p218 = pneg %p116
      %p219 = pneg %p113
      %p220 = scmp.lt.s32.totalorder %s19, 1
      %s221 = scalar_select %p220, %s19, 1
      %s222 = scalar_lea.vmem %s2, %s221
      %p223 = pneg %p142
      %p224 = pneg %p139
      %p225 = scmp.lt.s32.totalorder %s19, 1
      %s226 = scalar_select %p225, %s19, 1
      %s227 = scalar_lea.vmem %s3, %s226
      %s228 = smul.u32 %s19, 2
      %s229 = sadd.s32 %s228, %s20
      %p230 = scmp.lt.s32.totalorder %s229, 2
      %s231 = scalar_select %p230, %s229, 2
      %p232 = scmp.lt.s32.totalorder %s231, 2
      %s233 = scalar_select %p232, %s231, 2
      %s234 = smul.addr %s233, 8
      %s235 = scalar_lea.vmem %s0, %s234
      %s236 = smul.u32 %s19, 2
      %s237 = sadd.s32 %s236, %s20
      %p238 = scmp.lt.s32.totalorder %s237, 2
      %s239 = scalar_select %p238, %s237, 2
      %s240 = smul.u32 %s19, 2
      %s241 = sadd.s32 %s240, %s20
      %p242 = scmp.lt.s32.totalorder %s241, 2
      %s243 = scalar_select %p242, %s241, 2
      %p244 = scmp.lt.s32.totalorder %s243, 2
      %s245 = scalar_select %p244, %s243, 2
      %s246 = smul.addr %s245, 8
      %s247 = scalar_lea.vmem %s1, %s246
      %s248 = smul.u32 %s19, 2
      %s249 = sadd.s32 %s248, %s20
      %p250 = scmp.lt.s32.totalorder %s249, 2
      %s251 = scalar_select %p250, %s249, 2
      %p252 = scmp.lt.s32.totalorder %s19, 1
      %s253 = scalar_select %p252, %s19, 1
      %s254 = scalar_lea.vmem %s2, %s253
      %p255 = scmp.lt.s32.totalorder %s19, 1
      %s256 = scalar_select %p255, %s19, 1
      %s257 = scalar_lea.vmem %s3, %s256
      %p258 = scmp.eq.s32.totalorder %s20, 0
      // Predicated region
      $region29: #{tpu_custom_call.1} parent=27 // pred_check
        %p259 = pneg %p258
      $region30: #{tpu_custom_call.1} parent=27 // pred_check_branch
        %261 = sbr.rel (%p259) target = $region32
      $region31: #{tpu_custom_call.1} parent=27 // pred_region
        %vm262 = vcmask 0
        %263 = vst.msk [vmem:[%s254] sm:$0x1] %vm262, 0.0
        %264 = vst.msk [vmem:[%s257] sm:$0x1] %vm262, 0.0
      $region32: #{tpu_custom_call.1} parent=27 // pred_fallthru
        _
      %v265 = vld [vmem:[%s235] sm:$0xff]
      %v266 = vld [vmem:[%s247] sm:$0xff]
      %s267 = smul.u32 %s19, 2
      %s268 = sadd.s32 %s267, %s20
      %v269 = vlaneseq
      %v270 = vshrl.u32 %v269, 7
      %s271 = smul.u32 %s268, 8
      %v272 = vstv %s271
      %v273 = vadd.s32 %v270, %v272
      %vm274 = vcmp.lt.s32.totalorder %v273, 24
      %v275 = vlaneseq
      %v276 = vand.u32 %v275, 127
      %vm277 = vcmask 130048
      %v278 = vsel %vm277, %v265, -inf
      %279 = vmax.xlane.f32.xlu0 %v278
      %v280 = vpop.xlane.xlu0 %279
      %vm281 = vcmp.eq.f32.partialorder %v265, %v280
      %v282 = vsel %vm281, %v276, 16
      %v283 = vsel %vm277, %v282, 2147483647
      %v284 = vand.u32 %v283, 65535
      %v285 = vshra.s32 %v283, 16
      %v286 = vcvt.s32.f32 %v284
      %v287 = vcvt.s32.f32 %v285
      %288 = vmin.xlane.f32.xlu0 %v287
      %v289 = vpop.xlane.xlu0 %288
      %vm290 = vcmp.eq.f32.partialorder %v287, %v289
      %v291 = vsel %vm290, %v286, inf
      %292 = vmin.xlane.f32.xlu0 %v291
      %v293 = vpop.xlane.xlu0 %292
      %v294 = vcvt.f32.s32 %v293
      %v295 = vcvt.f32.s32 %v289
      %v296 = vshll.u32 %v295, 16
      %v297 = vadd.s32 %v296, %v294
      %vm298 = vcmp.ne.s32.totalorder %v266, 4294967196
      %vm299 = vmand %vm274, %vm298
      %v300 = vsel %vm299, 1, 0
      %v301 = vcvt.s32.f32 %v300
      %vm302 = vcmp.eq.s32.totalorder %v297, %v266
      %vm303 = vmand %vm299, %vm302
      %v304 = vsel %vm303, 1, 0
      %v305 = vcvt.s32.f32 %v304
      %v306 = vld [vmem:[%s254] sm:$0x1]
      %vm307 = vcmask 7168
      %v308 = vsel %vm307, %v305, 0.0
      %309 = vadd.xlane.f32.xlu0 %v308
      %v310 = vpop.xlane.xlu0 %309
      %v311 = vrot.slane %v310, 4
      %v312 = vadd.f32 %v310, %v311
      %v313 = vrot.slane %v312, 2
      %v314 = vadd.f32 %v312, %v313
      %v315 = vrot.slane %v314, 1
      %v316 = vadd.f32 %v314, %v315
      %s317 = vtos %v316
      %v318 = vstv %s317
      %v319 = vadd.f32 %v306, %v318
      %vm320 = vcmask 0
      %321 = vst.msk [vmem:[%s254] sm:$0x1] %vm320, %v319
      %v322 = vld [vmem:[%s257] sm:$0x1]
      %v323 = vsel %vm307, %v301, 0.0
      %324 = vadd.xlane.f32.xlu0 %v323
      %v325 = vpop.xlane.xlu0 %324
      %v326 = vrot.slane %v325, 4
      %v327 = vadd.f32 %v325, %v326
      %v328 = vrot.slane %v327, 2
      %v329 = vadd.f32 %v327, %v328
      %v330 = vrot.slane %v329, 1
      %v331 = vadd.f32 %v329, %v330
      %s332 = vtos %v331
      %v333 = vstv %s332
      %v334 = vadd.f32 %v322, %v333
      %335 = vst.msk [vmem:[%s257] sm:$0x1] %vm320, %v334
      %p336 = scmp.lt.s32.totalorder %s19, 1
      %s337 = scalar_select %p336, %s19, 1
      %s338 = scalar_lea.vmem %s2, %s337
      %p339 = scmp.lt.s32.totalorder %s19, 1
      %s340 = scalar_select %p339, %s19, 1
      %s341 = scalar_lea.vmem %s3, %s340
      // Predicated region
      $region33: #{tpu_custom_call.1} parent=27 // pred_check
        %p342 = pneg %p113
      $region34: #{tpu_custom_call.1} parent=27 // pred_check_branch
        %344 = sbr.rel (%p342) target = $region36
      $region35: #{tpu_custom_call.1} parent=27 // pred_region
        _
      $region36: #{tpu_custom_call.1} parent=27 // pred_fallthru
        _
      // Predicated region
      $region37: #{tpu_custom_call.1} parent=27 // pred_check
        %p345 = pneg %p139
      $region38: #{tpu_custom_call.1} parent=27 // pred_check_branch
        %347 = sbr.rel (%p345) target = $region40
      $region39: #{tpu_custom_call.1} parent=27 // pred_region
        _
      $region40: #{tpu_custom_call.1} parent=27 // pred_fallthru
        _
    $region28: #{tpu_custom_call.1} parent=5 // pred_fallthru
      _
    %p348 = scmp.le.s32.totalorder 2, %s10
    // Predicated region
    $region41: #{tpu_custom_call.1} parent=5 // pred_check
      %p349 = pneg %p348
    $region42: #{tpu_custom_call.1} parent=5 // pred_check_branch
      %351 = sbr.rel (%p349) target = $region44
    $region43: #{tpu_custom_call.1} parent=5 // pred_region
      %s352 = ssub.s32 %s10, 2
      // Predicated region
      $region45: #{tpu_custom_call.1} parent=43 // pred_check
        %p353 = pneg %p119
      $region46: #{tpu_custom_call.1} parent=43 // pred_check_branch
        %355 = sbr.rel (%p353) target = $region48
      $region47: #{tpu_custom_call.1} parent=43 // pred_region
        %p356 = scmp.lt.s32.totalorder %s21, 1
        %s357 = scalar_select %p356, %s21, 1
        %s358 = scalar_lea.vmem %s2, %s357
      $region48: #{tpu_custom_call.1} parent=43 // pred_fallthru
        _
      // Predicated region
      $region49: #{tpu_custom_call.1} parent=43 // pred_check
        %p359 = pneg %p145
      $region50: #{tpu_custom_call.1} parent=43 // pred_check_branch
        %361 = sbr.rel (%p359) target = $region52
      $region51: #{tpu_custom_call.1} parent=43 // pred_region
        %p362 = scmp.lt.s32.totalorder %s21, 1
        %s363 = scalar_select %p362, %s21, 1
        %s364 = scalar_lea.vmem %s3, %s363
      $region52: #{tpu_custom_call.1} parent=43 // pred_fallthru
        _
    $region44: #{tpu_custom_call.1} parent=5 // pred_fallthru
      _
  $region6: #{tpu_custom_call.1} parent=0 // loop_footer
    %s14 = sadd.s32 1, %s10
  $region7: #{tpu_custom_call.1} parent=0 // loop_footer_branch
    %9 = sbr.rel target = $region3
  $region8: #{tpu_custom_call.1} parent=0 // loop_exit
    _

</llo_original>
